<compile_context>
chip_gen: v5e
topology: v5e:2x2
jax: 0.10.0
libtpu: 0.0.40
codegen_flags: <defaults>
</compile_context>

<pallas_src>
import jax
import jax.numpy as jnp
from jax.experimental import pallas as pl
from jax.experimental.pallas import tpu as pltpu


def _round_up(x, m):
    return ((x + m - 1) // m) * m


def _vmem_capacity_bytes():
    try:
        return int(pltpu.get_tpu_info().vmem_capacity_bytes)
    except Exception:
        # Conservative fallback (v7x per-core physical VMEM).
        return 64 * 1024 * 1024


def classifier_head_forward(encoded, weight_t, bias, labels, *,
                            tile_b_max=2048, logits_dtype=jnp.float32):
    """One classifier head: logits = encoded @ weight_t + bias, mean-CE loss.

    encoded:  [B, H]  (dtype preserved — no wrapper-side cast/copy)
    weight_t: [H, L]  (transpose of PyTorch's [L, H] Linear weight)
    bias:     [L]
    labels:   [B] int
    Returns (loss scalar f32, logits [B, L] logits_dtype).

    NOTE: on v5e, passing logits_dtype=jnp.bfloat16 halves the masked-store /
    writeback cost if downstream tolerates it.
    """
    B, H = encoded.shape
    L = weight_t.shape[1]

    # ---- VMEM-aware batch tile ------------------------------------------
    cap = _vmem_capacity_bytes()
    vmem_limit = min(cap * 3 // 4, 100 * 1024 * 1024)
    budget = int(vmem_limit * 0.7)
    lpad = _round_up(L, 128)                       # lane padding inside VMEM
    in_buf_max = 3
    bytes_per_row = (in_buf_max * H + 2 * lpad + 2 * 128) * 4
    fixed_bytes = (2 * H * lpad + 2 * lpad + 4096) * 4
    tb = min(tile_b_max, max(8, (budget - fixed_bytes) // bytes_per_row),
             _round_up(B, 8))
    tb = max(8, (tb // 8) * 8)

    nt = (B + tb - 1) // tb                        # total batch tiles
    n_split = 2 if nt >= 2 else 1                  # megacore split of batch
    n_bt = (nt + n_split - 1) // n_split           # tiles per split
    needs_clamp = (n_split * n_bt != nt)

    def tile_index(s, bt):
        g = s * n_bt + bt
        if needs_clamp:
            # Redundant tail cell re-visits the last tile; its loss rows are
            # masked (row index uses the UNclamped g) and its logits write is
            # byte-identical, so this is safe.
            g = jnp.minimum(g, nt - 1)
        return g

    # Tiny side inputs only — the big activation is untouched in the wrapper.
    w_in = weight_t.astype(encoded.dtype)          # [H, L]
    bias2 = bias.astype(jnp.float32).reshape(1, L)
    labels2 = labels.astype(jnp.int32).reshape(B, 1)

    def kernel(x_ref, w_ref, b_ref, lab_ref, loss_ref, logits_ref):
        s = pl.program_id(0)
        bt = pl.program_id(1)
        g = s * pl.num_programs(1) + bt            # unclamped global tile idx

        @pl.when(bt == 0)
        def _init():
            loss_ref[...] = jnp.zeros_like(loss_ref)

        # Linear head on the MXU, f32 accumulate.
        logits = jnp.dot(x_ref[...], w_ref[...],
                         preferred_element_type=jnp.float32) + b_ref[...]
        logits_ref[...] = logits.astype(logits_ref.dtype)

        # Numerically stable log-softmax cross-entropy.
        m = jnp.max(logits, axis=-1, keepdims=True)
        lse = m + jnp.log(jnp.sum(jnp.exp(logits - m), axis=-1, keepdims=True))
        cols = jax.lax.broadcasted_iota(jnp.int32, (tb, L), 1)
        tgt = jnp.sum(jnp.where(cols == lab_ref[...], logits, 0.0),
                      axis=-1, keepdims=True)
        per_example = lse - tgt                    # (tb, 1)

        # Mask rows beyond the true batch (partial / duplicated tail tiles).
        rows = jax.lax.broadcasted_iota(jnp.int32, (tb, 1), 0) + g * tb
        per_example = jnp.where(rows < B, per_example, 0.0)

        # Accumulate directly into the resident per-split loss output block.
        loss_ref[0] += jnp.sum(per_example, axis=0, keepdims=True)

    # Encoded stream: go 3-deep only when the per-split grid is long enough
    # for the extra buffer to hide anything.
    if n_bt >= 3:
        try:
            enc_spec = pl.BlockSpec((tb, H), lambda s, bt: (tile_index(s, bt), 0),
                                    pipeline_mode=pl.Buffered(3))
        except TypeError:
            enc_spec = pl.BlockSpec((tb, H), lambda s, bt: (tile_index(s, bt), 0))
    else:
        enc_spec = pl.BlockSpec((tb, H), lambda s, bt: (tile_index(s, bt), 0))

    loss_part, logits = pl.pallas_call(
        kernel,
        out_shape=(
            jax.ShapeDtypeStruct((n_split, 1, 1), jnp.float32),   # partial CE sums
            jax.ShapeDtypeStruct((B, L), logits_dtype),           # logits
        ),
        grid_spec=pltpu.PrefetchScalarGridSpec(
            num_scalar_prefetch=0,
            grid=(n_split, n_bt),
            in_specs=[
                enc_spec,                                                   # encoded
                pl.BlockSpec((H, L), lambda s, bt: (0, 0)),                 # weight_t
                pl.BlockSpec((1, L), lambda s, bt: (0, 0)),                 # bias
                pl.BlockSpec((tb, 1), lambda s, bt: (tile_index(s, bt), 0)),  # labels
            ],
            out_specs=(
                pl.BlockSpec((1, 1, 1), lambda s, bt: (s, 0, 0)),           # loss
                pl.BlockSpec((tb, L), lambda s, bt: (tile_index(s, bt), 0)),  # logits
            ),
        ),
        compiler_params=pltpu.CompilerParams(
            dimension_semantics=("parallel", "arbitrary"),
            vmem_limit_bytes=int(vmem_limit),
        ),
    )(encoded, w_in, bias2, labels2)

    loss = jnp.sum(loss_part) / jnp.float32(B)
    return loss, logits


def one_teacher_one_student_forward(params, teacher_data, student_data):
    """Mirrors OneTeacherOneStudent.forward for the classifier-head portion.

    teacher_data / student_data: dicts with 'encoded' ([B,H] pooled BERT
    output; dropout = identity in eval) and 'labels' ([B] int), or None.
    """
    out = {"output_teacher": [None, None], "output_student": [None, None]}
    for name, data in (("teacher", teacher_data), ("student", student_data)):
        if data is None:
            continue
        # TODO(synk): self.bert (external pretrained encoder) + dropout are not
        # re-implemented; `encoded` is the encoder's pooled output.
        loss, logits = classifier_head_forward(
            data["encoded"], params[name]["weight_t"], params[name]["bias"],
            data["labels"])
        out[f"output_{name}"] = [loss, logits]
    return out


def init_params(key, hidden_size, num_labels):
    """Deterministic init of the two nn.Linear(hidden_size, num_labels) heads."""
    k1, k2, k3, k4 = jax.random.split(key, 4)
    bound = 1.0 / jnp.sqrt(hidden_size)
    # Stored as [hidden, num_labels] (transpose of PyTorch's [num_labels, hidden]).
    return {
        "num_labels": num_labels,
        "teacher": {
            "weight_t": jax.random.uniform(k1, (hidden_size, num_labels),
                                           jnp.float32, -bound, bound),
            "bias": jax.random.uniform(k2, (num_labels,), jnp.float32,
                                       -bound, bound),
        },
        "student": {
            "weight_t": jax.random.uniform(k3, (hidden_size, num_labels),
                                           jnp.float32, -bound, bound),
            "bias": jax.random.uniform(k4, (num_labels,), jnp.float32,
                                       -bound, bound),
        },
    }


if __name__ == "__main__":
    # Small synthetic shapes: batch=8, hidden=32, num_labels=4
    B, H, L = 8, 32, 4
    key = jax.random.PRNGKey(0)
    kp, kt, ks, klt, kls = jax.random.split(key, 5)

    params = init_params(kp, H, L)

    teacher_data = {
        "encoded": jax.random.normal(kt, (B, H), jnp.float32),
        "labels": jax.random.randint(klt, (B,), 0, L, jnp.int32),
    }
    student_data = {
        "encoded": jax.random.normal(ks, (B, H), jnp.float32),
        "labels": jax.random.randint(kls, (B,), 0, L, jnp.int32),
    }

    out = one_teacher_one_student_forward(params, teacher_data, student_data)
    jax.block_until_ready(out)

    # Pure-JAX reference of the same math (f32).
    def ref_head(x, wt, b, labels):
        logits = x @ wt + b
        lse = jax.nn.logsumexp(logits, axis=-1)
        tgt = jnp.take_along_axis(logits, labels[:, None], axis=-1)[:, 0]
        return jnp.mean(lse - tgt), logits

    rl_t, rlog_t = ref_head(teacher_data["encoded"],
                            params["teacher"]["weight_t"],
                            params["teacher"]["bias"], teacher_data["labels"])
    rl_s, rlog_s = ref_head(student_data["encoded"],
                            params["student"]["weight_t"],
                            params["student"]["bias"], student_data["labels"])

    assert out["output_teacher"][1].shape == (B, L)
    assert out["output_student"][1].shape == (B, L)
    assert jnp.allclose(out["output_teacher"][0], rl_t, atol=1e-2, rtol=1e-2)
    assert jnp.allclose(out["output_teacher"][1], rlog_t, atol=1e-2, rtol=1e-2)
    assert jnp.allclose(out["output_student"][0], rl_s, atol=1e-2, rtol=1e-2)
    assert jnp.allclose(out["output_student"][1], rlog_s, atol=1e-2, rtol=1e-2)

    print("KERNEL_OK")
</pallas_src>

<mosaic_0001>
module attributes {stable_mosaic.version = 11 : i64} {
  func.func @kernel(%arg0: i32, %arg1: i32, %arg2: memref<8x32xf32, #tpu.memory_space<vmem>>, %arg3: memref<32x4xf32, #tpu.memory_space<vmem>>, %arg4: memref<1x4xf32, #tpu.memory_space<vmem>>, %arg5: memref<8x1xi32, #tpu.memory_space<vmem>>, %arg6: memref<1x1x1xf32, #tpu.memory_space<vmem>>, %arg7: memref<8x4xf32, #tpu.memory_space<vmem>>) attributes {dimension_semantics = [#tpu.dimension_semantics<parallel>, #tpu.dimension_semantics<arbitrary>], iteration_bounds = array<i64: 1, 1>, scalar_prefetch = 0 : i64, scratch_operands = 0 : i64, tpu.core_type = #tpu.core_type<tc>, window_params = [{transform_indices = @transform_0, window_bounds = array<i64: 8, 32>}, {pipeline_mode = #tpu.pipeline_mode<synchronous>, transform_indices = @transform_1, window_bounds = array<i64: 32, 4>}, {pipeline_mode = #tpu.pipeline_mode<synchronous>, transform_indices = @transform_2, window_bounds = array<i64: 1, 4>}, {transform_indices = @transform_3, window_bounds = array<i64: 8, 1>}, {transform_indices = @transform_4, window_bounds = array<i64: 1, 1, 1>}, {transform_indices = @transform_5, window_bounds = array<i64: 8, 4>}]} {
    %c1_i32 = arith.constant 1 : i32
    %0 = arith.muli %arg0, %c1_i32 : i32
    %1 = arith.addi %0, %arg1 : i32
    %c0_i32 = arith.constant 0 : i32
    %2 = arith.cmpi eq, %arg1, %c0_i32 : i32
    %3 = arith.extui %2 : i1 to i32
    %c0_i32_0 = arith.constant 0 : i32
    %4 = arith.cmpi ne, %3, %c0_i32_0 : i32
    scf.if %4 {
      %cst_23 = arith.constant 0.000000e+00 : f32
      %46 = vector.broadcast %cst_23 : f32 to vector<1x1x1xf32>
      %c0_24 = arith.constant 0 : index
      %c0_25 = arith.constant 0 : index
      %c0_26 = arith.constant 0 : index
      %47 = vector.load %arg6[%c0_24, %c0_25, %c0_26] : memref<1x1x1xf32, #tpu.memory_space<vmem>>, vector<1x1x1xf32>
      tpu.vector_store %arg6[%c0_24, %c0_25, %c0_26], %46 {strides = array<i32>} : memref<1x1x1xf32, #tpu.memory_space<vmem>>, vector<1x1x1xf32>,
    } else {
    }
    %c0 = arith.constant 0 : index
    %c0_1 = arith.constant 0 : index
    %5 = vector.load %arg2[%c0, %c0_1] : memref<8x32xf32, #tpu.memory_space<vmem>>, vector<8x32xf32>
    %c0_2 = arith.constant 0 : index
    %c0_3 = arith.constant 0 : index
    %6 = vector.load %arg3[%c0_2, %c0_3] : memref<32x4xf32, #tpu.memory_space<vmem>>, vector<32x4xf32>
    %cst = arith.constant dense<0.000000e+00> : vector<8x4xf32>
    %7 = tpu.matmul %5, %6, %cst {dimension_numbers = #tpu.dot_dimension_numbers<[1], [0], [0], [1], [0, 0, 1, 1], [], []>} : vector<8x32xf32>, vector<32x4xf32>, vector<8x4xf32> -> vector<8x4xf32>
    %c0_4 = arith.constant 0 : index
    %c0_5 = arith.constant 0 : index
    %8 = vector.load %arg4[%c0_4, %c0_5] : memref<1x4xf32, #tpu.memory_space<vmem>>, vector<1x4xf32>
    %9 = vector.broadcast %8 : vector<1x4xf32> to vector<8x4xf32>
    %10 = arith.addf %7, %9 : vector<8x4xf32>
    %c0_6 = arith.constant 0 : index
    %c0_7 = arith.constant 0 : index
    %11 = vector.load %arg7[%c0_6, %c0_7] : memref<8x4xf32, #tpu.memory_space<vmem>>, vector<8x4xf32>
    tpu.vector_store %arg7[%c0_6, %c0_7], %10 {strides = array<i32>} : memref<8x4xf32, #tpu.memory_space<vmem>>, vector<8x4xf32>,
    %cst_8 = arith.constant dense<0xFF800000> : vector<8xf32>
    %12 = vector.multi_reduction <maximumf>, %10, %cst_8 [1] : vector<8x4xf32> to vector<8xf32>
    %13 = vector.shape_cast %12 : vector<8xf32> to vector<8x1xf32>
    %14 = vector.broadcast %13 : vector<8x1xf32> to vector<8x4xf32>
    %15 = arith.subf %10, %14 : vector<8x4xf32>
    %16 = math.exp %15 : vector<8x4xf32>
    %cst_9 = arith.constant dense<0.000000e+00> : vector<8xf32>
    %17 = vector.multi_reduction <add>, %16, %cst_9 [1] : vector<8x4xf32> to vector<8xf32>
    %18 = vector.shape_cast %17 : vector<8xf32> to vector<8x1xf32>
    %19 = math.log %18 : vector<8x1xf32>
    %20 = arith.addf %13, %19 : vector<8x1xf32>
    %21 = tpu.iota {dimensions = array<i32: 1>} : vector<8x4xi32>
    %c0_10 = arith.constant 0 : index
    %c0_11 = arith.constant 0 : index
    %22 = vector.load %arg5[%c0_10, %c0_11] : memref<8x1xi32, #tpu.memory_space<vmem>>, vector<8x1xi32>
    %23 = vector.broadcast %22 : vector<8x1xi32> to vector<8x4xi32>
    %24 = arith.cmpi eq, %21, %23 : vector<8x4xi32>
    %cst_12 = arith.constant 0.000000e+00 : f32
    %25 = vector.broadcast %cst_12 : f32 to vector<8x4xf32>
    %26 = arith.select %24, %10, %25 : vector<8x4xi1>, vector<8x4xf32>
    %cst_13 = arith.constant dense<0.000000e+00> : vector<8xf32>
    %27 = vector.multi_reduction <add>, %26, %cst_13 [1] : vector<8x4xf32> to vector<8xf32>
    %28 = vector.shape_cast %27 : vector<8xf32> to vector<8x1xf32>
    %29 = arith.subf %20, %28 : vector<8x1xf32>
    %30 = tpu.iota {dimensions = array<i32: 0>} : vector<8x1xi32>
    %c8_i32 = arith.constant 8 : i32
    %31 = arith.muli %1, %c8_i32 : i32
    %32 = vector.broadcast %31 : i32 to vector<8x1xi32>
    %33 = arith.addi %30, %32 : vector<8x1xi32>
    %c8_i32_14 = arith.constant 8 : i32
    %34 = vector.broadcast %c8_i32_14 : i32 to vector<8x1xi32>
    %35 = arith.cmpi slt, %33, %34 : vector<8x1xi32>
    %cst_15 = arith.constant 0.000000e+00 : f32
    %36 = vector.broadcast %cst_15 : f32 to vector<8x1xf32>
    %37 = arith.select %35, %29, %36 : vector<8x1xi1>, vector<8x1xf32>
    %c0_16 = arith.constant 0 : index
    %c0_17 = arith.constant 0 : index
    %c0_18 = arith.constant 0 : index
    %38 = vector.load %arg6[%c0_16, %c0_17, %c0_18] : memref<1x1x1xf32, #tpu.memory_space<vmem>>, vector<1x1x1xf32>
    %39 = vector.shape_cast %38 : vector<1x1x1xf32> to vector<1x1xf32>
    %cst_19 = arith.constant dense<0.000000e+00> : vector<1xf32>
    %40 = vector.multi_reduction <add>, %37, %cst_19 [0] : vector<8x1xf32> to vector<1xf32>
    %41 = vector.shape_cast %40 : vector<1xf32> to vector<1x1xf32>
    %42 = arith.addf %39, %41 : vector<1x1xf32>
    %c0_20 = arith.constant 0 : index
    %c0_21 = arith.constant 0 : index
    %c0_22 = arith.constant 0 : index
    %43 = vector.load %arg6[%c0_20, %c0_21, %c0_22] : memref<1x1x1xf32, #tpu.memory_space<vmem>>, vector<1x1x1xf32>
    %44 = vector.shape_cast %43 : vector<1x1x1xf32> to vector<1x1xf32>
    %45 = vector.shape_cast %42 : vector<1x1xf32> to vector<1x1x1xf32>
    tpu.vector_store %arg6[%c0_20, %c0_21, %c0_22], %45 {strides = array<i32>} : memref<1x1x1xf32, #tpu.memory_space<vmem>>, vector<1x1x1xf32>,
    return
  }
  func.func @transform_0(%arg0: i32, %arg1: i32) -> (i32, i32) {
    %c1_i32 = arith.constant 1 : i32
    %0 = arith.muli %arg0, %c1_i32 : i32
    %1 = arith.addi %0, %arg1 : i32
    %c0_i32 = arith.constant 0 : i32
    %c0_i32_0 = arith.constant 0 : i32
    return %1, %c0_i32 : i32, i32
  }
  func.func @transform_1(%arg0: i32, %arg1: i32) -> (i32, i32) {
    %c0_i32 = arith.constant 0 : i32
    %c0_i32_0 = arith.constant 0 : i32
    %c0_i32_1 = arith.constant 0 : i32
    return %c0_i32, %c0_i32_0 : i32, i32
  }
  func.func @transform_2(%arg0: i32, %arg1: i32) -> (i32, i32) {
    %c0_i32 = arith.constant 0 : i32
    %c0_i32_0 = arith.constant 0 : i32
    %c0_i32_1 = arith.constant 0 : i32
    return %c0_i32, %c0_i32_0 : i32, i32
  }
  func.func @transform_3(%arg0: i32, %arg1: i32) -> (i32, i32) {
    %c1_i32 = arith.constant 1 : i32
    %0 = arith.muli %arg0, %c1_i32 : i32
    %1 = arith.addi %0, %arg1 : i32
    %c0_i32 = arith.constant 0 : i32
    %c0_i32_0 = arith.constant 0 : i32
    return %1, %c0_i32 : i32, i32
  }
  func.func @transform_4(%arg0: i32, %arg1: i32) -> (i32, i32, i32) {
    %c0_i32 = arith.constant 0 : i32
    %c0_i32_0 = arith.constant 0 : i32
    %c0_i32_1 = arith.constant 0 : i32
    return %arg0, %c0_i32, %c0_i32_0 : i32, i32, i32
  }
  func.func @transform_5(%arg0: i32, %arg1: i32) -> (i32, i32) {
    %c1_i32 = arith.constant 1 : i32
    %0 = arith.muli %arg0, %c1_i32 : i32
    %1 = arith.addi %0, %arg1 : i32
    %c0_i32 = arith.constant 0 : i32
    %c0_i32_0 = arith.constant 0 : i32
    return %1, %c0_i32 : i32, i32
  }
}

</mosaic_0001>

<llo_original>
// kernel: tpu_custom_call.1
$region0: #{tpu_custom_call.1}
  #allocation0 [shape = 'u32[]', space=smem, size = 0x4, offset = 0x4, fixed_abs, tag = 'smem constant byte address 0x4 - core index']
  #allocation1 [shape = 'u32[72,128]{1,0:T(1,128)}', space=vmem, size = 0x9000, scoped, tag = 'internal scratch']
  %s0 = inlined_call_operand.vmem [shape: f32[8,32], index: 0, kind: input, shape index: {}]
  %s1 = inlined_call_operand.vmem [shape: f32[32,4], index: 1, kind: input, shape index: {}]
  %s2 = inlined_call_operand.vmem [shape: f32[1,4], index: 2, kind: input, shape index: {}]
  %s3 = inlined_call_operand.vmem [shape: s32[8,1], index: 3, kind: input, shape index: {}]
  %s4 = inlined_call_operand.hbm [shape: f32[1,1,1], index: 4, kind: output, shape index: {0}]
  %s5 = inlined_call_operand.vmem [shape: f32[8,4], index: 5, kind: output, shape index: {1}]
  %6 = xla_tuple %s4, %s5
  %s7 = sld [smem:[#allocation0]]
  $region38: #{tpu_custom_call.1} parent=0
    _
  %s9 = ssub.s32 1, %s7
  %s10 = scalar_select 0, %s9, %s7
  $region1: #{tpu_custom_call.1} parent=0
    #allocation2 [shape = 'u8[512]{0}', space=vmem, size = 0x400, scoped, tag = 'output window, operand 0, single buffered']
    #allocation3 [shape = 's32[1]{0}', space=sflag, size = 0x4, scoped, tag = 'scoped memory for tpu_custom_call.1']
    %11 = vsyncpa [#allocation3], 0
    // Predicated region
    $region2: #{tpu_custom_call.1} parent=1 // pred_check
      _
    $region3: #{tpu_custom_call.1} parent=1 // pred_check_branch
      %13 = sbr.rel (0) target = $region5
    $region4: #{tpu_custom_call.1} parent=1 // pred_region
      %s14 = sadd.s32 0, 0
      %p15 = scmp.lt.s32.totalorder %s14, 0
      %s16 = scalar_select %p15, %s14, 0
      %s17 = smul.addr %s16, 8
      %s18 = scalar_lea.vmem %s0, %s17
      %s19 = sadd.s32 0, 0
    $region5: #{tpu_custom_call.1} parent=1 // pred_fallthru
      _
    // Predicated region
    $region6: #{tpu_custom_call.1} parent=1 // pred_check
      _
    $region7: #{tpu_custom_call.1} parent=1 // pred_check_branch
      %21 = sbr.rel (0) target = $region9
    $region8: #{tpu_custom_call.1} parent=1 // pred_region
      _
    $region9: #{tpu_custom_call.1} parent=1 // pred_fallthru
      _
    // Predicated region
    $region10: #{tpu_custom_call.1} parent=1 // pred_check
      _
    $region11: #{tpu_custom_call.1} parent=1 // pred_check_branch
      %23 = sbr.rel (0) target = $region13
    $region12: #{tpu_custom_call.1} parent=1 // pred_region
      _
    $region13: #{tpu_custom_call.1} parent=1 // pred_fallthru
      _
    // Predicated region
    $region14: #{tpu_custom_call.1} parent=1 // pred_check
      _
    $region15: #{tpu_custom_call.1} parent=1 // pred_check_branch
      %25 = sbr.rel (0) target = $region17
    $region16: #{tpu_custom_call.1} parent=1 // pred_region
      %s26 = sadd.s32 0, 0
      %p27 = scmp.lt.s32.totalorder %s26, 0
      %s28 = scalar_select %p27, %s26, 0
      %s29 = smul.addr %s28, 8
      %s30 = scalar_lea.vmem %s3, %s29
      %s31 = sadd.s32 0, 0
    $region17: #{tpu_custom_call.1} parent=1 // pred_fallthru
      _
    %s32 = sadd.s32 0, 0
    %p33 = scmp.lt.s32.totalorder %s32, 0
    %s34 = scalar_select %p33, %s32, 0
    %s35 = smul.addr %s34, 8
    %s36 = scalar_lea.vmem %s0, %s35
    %s37 = sadd.s32 0, 0
    %p38 = scmp.lt.s32.totalorder %s37, 0
    %s39 = scalar_select %p38, %s37, 0
    %s40 = smul.addr %s39, 8
    %s41 = scalar_lea.vmem %s3, %s40
    %s42 = sadd.s32 0, 0
    %p43 = scmp.lt.s32.totalorder %s42, 0
    %s44 = scalar_select %p43, %s42, 0
    %s45 = smul.addr %s44, 8
    %s46 = scalar_lea.vmem %s5, %s45
    %s47 = sadd.s32 0, 0
    %p48 = scmp.lt.s32.totalorder %s47, 0
    %s49 = scalar_select %p48, %s47, 0
    %s50 = smul.addr %s49, 8
    %s51 = scalar_lea.vmem %s0, %s50
    %s52 = sadd.s32 0, 0
    %s53 = sadd.s32 0, 0
    %p54 = scmp.lt.s32.totalorder %s53, 0
    %s55 = scalar_select %p54, %s53, 0
    %s56 = smul.addr %s55, 8
    %s57 = scalar_lea.vmem %s3, %s56
    %s58 = sadd.s32 0, 0
    %s59 = sadd.s32 0, 0
    %p60 = scmp.lt.s32.totalorder %s59, 0
    %s61 = scalar_select %p60, %s59, 0
    %s62 = smul.addr %s61, 8
    %s63 = scalar_lea.vmem %s5, %s62
    %s64 = sadd.s32 0, 0
    %s65 = sadd.s32 0, 0
    %p66 = scmp.eq.s32.totalorder 0, 0
    // Predicated region
    $region18: #{tpu_custom_call.1} parent=1 // pred_check
      %p67 = pneg %p66
    $region19: #{tpu_custom_call.1} parent=1 // pred_check_branch
      %69 = sbr.rel (%p67) target = $region21
    $region20: #{tpu_custom_call.1} parent=1 // pred_region
      %vm70 = vcmask 0
      %71 = vst.msk [vmem:[#allocation2] sm:$0x1] %vm70, 0.0
    $region21: #{tpu_custom_call.1} parent=1 // pred_fallthru
      _
    %v72 = vld [vmem:[%s51] sm:$0xff]
    %v73 = vld [vmem:[%s1] sm:$0xff]
    %v74 = vld [vmem:[%s1 + $0x8] sm:$0xff]
    %v75 = vld [vmem:[%s1 + $0x10] sm:$0xff]
    %v76 = vld [vmem:[%s1 + $0x18] sm:$0xff]
    %v77 = vld [vmem:[%s2] sm:$0x1]
    %v79 = vperm.slane %v77, 0
    %vm81 = vcmask 261120
    %v83 = vsel %vm81, %v72, 0
    %85 = vmatpush.msra.mxu0 0.0
    %86 = vmatpush.msra.mxu0 0.0
    %87 = vmatpush.msra.mxu0 0.0
    %88 = vmatpush.msra.mxu0 0.0
    %89 = vmatpush.msra.mxu0 0.0
    %90 = vmatpush.msra.mxu0 0.0
    %91 = vmatpush.msra.mxu0 0.0
    %92 = vmatpush.msra.mxu0 0.0
    %93 = vmatpush.msra.mxu0 0.0
    %94 = vmatpush.msra.mxu0 0.0
    %95 = vmatpush.msra.mxu0 0.0
    %96 = vmatpush.msra.mxu0 0.0
    %97 = vmatpush.msra.mxu0 %v76
    %98 = vmatpush.msra.mxu0 %v75
    %99 = vmatpush.msra.mxu0 %v74
    %100 = vmatpush.msra.mxu0 %v73
    %101 = vmatmul.f32.gmra.mxu0 %v83
    %v102 = vpop.f32.mrf.mxu0
    %v103 = vadd.f32 %v79, %v102
    %104 = vdwg.mxu0
    %vm105 = vcmask 31744
    %106 = vst.msk [vmem:[%s63] sm:$0xff] %vm105, %v103
    %v107 = vsel %vm105, %v103, -inf
    %108 = vmax.xlane.f32.xlu0 %v107
    %v109 = vpop.xlane.xlu0 %108
    %v110 = vsub.f32 %v103, %v109
    %v111 = vmul.f32 %v110, 1.442695
    %v112 = vpow.pop %v111
    %v113 = vsel %vm105, %v112, 0.0
    %114 = vadd.xlane.f32.xlu0 %v113
    %v115 = vpop.xlane.xlu0 %114
    %v116 = vlog2.pop %v115
    %v117 = vmul.f32 %v116, 0.6931472
    %v118 = vadd.f32 %v109, %v117
    %v119 = vlaneseq
    %v120 = vand.u32 %v119, 127
    %v121 = vld [vmem:[%s57] sm:$0xff]
    %122 = vset.pattern.permute.xlu0 0
    %123 = vperm.xlu0 %122, %v121
    %v124 = vpop.permute.xlu0 %123
    %vm125 = vcmp.eq.s32.totalorder %v120, %v124
    %v126 = vsel %vm125, %v103, 0.0
    %v127 = vsel %vm105, %v126, 0.0
    %128 = vadd.xlane.f32.xlu0 %v127
    %v129 = vpop.xlane.xlu0 %128
    %v130 = vsub.f32 %v118, %v129
    %v131 = vlaneseq
    %v132 = vshrl.u32 %v131, 7
    %s133 = smul.u32 %s65, 8
    %v134 = vstv %s133
    %v135 = vadd.s32 %v132, %v134
    %vm136 = vcmp.lt.s32.totalorder %v135, 8
    %v137 = vsel %vm136, %v130, 0.0
    %v138 = vld [vmem:[#allocation2] sm:$0x1]
    %v139 = vrot.slane %v137, 4
    %v140 = vadd.f32 %v137, %v139
    %v141 = vrot.slane %v140, 2
    %v142 = vadd.f32 %v140, %v141
    %v143 = vrot.slane %v142, 1
    %v144 = vadd.f32 %v142, %v143
    %v145 = vadd.f32 %v138, %v144
    %vm146 = vcmask 0
    %147 = vst.msk [vmem:[#allocation2] sm:$0x1] %vm146, %v145
    %s148 = sadd.s32 0, 0
    %p149 = scmp.lt.s32.totalorder %s148, 0
    %s150 = scalar_select %p149, %s148, 0
    %s151 = smul.addr %s150, 8
    %s152 = scalar_lea.vmem %s5, %s151
    // Predicated region
    $region22: #{tpu_custom_call.1} parent=1 // pred_check
      _
    $region23: #{tpu_custom_call.1} parent=1 // pred_check_branch
      %154 = sbr.rel (0) target = $region25
    $region24: #{tpu_custom_call.1} parent=1 // pred_region
      %156 = vsyncadd [#allocation3], 0
      %s158 = sshll.u32 [#allocation2], 4
      %s159 = int_to_ptr.vmem [resolvable:$true] %s158
      %s160 = sshll.u32 %s4, 4
      %s161 = int_to_ptr.hbm [resolvable:$true] %s160
      %163 = dma.vmem_to_hbm [thread:$0]  %s159, 16, %s161, [#allocation3]
    $region25: #{tpu_custom_call.1} parent=1 // pred_fallthru
      _
    // Predicated region
    $region26: #{tpu_custom_call.1} parent=1 // pred_check
      _
    $region27: #{tpu_custom_call.1} parent=1 // pred_check_branch
      %165 = sbr.rel (0) target = $region29
    $region28: #{tpu_custom_call.1} parent=1 // pred_region
      %s166 = sadd.s32 0, 0
    $region29: #{tpu_custom_call.1} parent=1 // pred_fallthru
      _
    // Predicated region
    $region30: #{tpu_custom_call.1} parent=1 // pred_check
      _
    $region31: #{tpu_custom_call.1} parent=1 // pred_check_branch
      %168 = sbr.rel (0) target = $region33
    $region32: #{tpu_custom_call.1} parent=1 // pred_region
      %170 = dma.done [#allocation3], 16
    $region33: #{tpu_custom_call.1} parent=1 // pred_fallthru
      _
    // Predicated region
    $region34: #{tpu_custom_call.1} parent=1 // pred_check
      _
    $region35: #{tpu_custom_call.1} parent=1 // pred_check_branch
      %172 = sbr.rel (0) target = $region37
    $region36: #{tpu_custom_call.1} parent=1 // pred_region
      %s173 = sadd.s32 0, 0
      %p174 = scmp.lt.s32.totalorder %s173, 0
      %s175 = scalar_select %p174, %s173, 0
      %s176 = smul.addr %s175, 8
      %s177 = scalar_lea.vmem %s5, %s176
    $region37: #{tpu_custom_call.1} parent=1 // pred_fallthru
      _
    %178 = vsyncpa [#allocation3], 1

</llo_original>
